<compile_context>
chip_gen: v5e
topology: v5e:2x2
jax: 0.10.0
libtpu: 0.0.40
codegen_flags: <defaults>
</compile_context>

<pallas_src>
import jax
import jax.numpy as jnp
import numpy as np
from jax.experimental import pallas as pl
from jax.experimental.pallas import tpu as pltpu  # noqa: F401  (kept for TPU-specific params if needed)

# ----- small, module-consistent shapes -----
B, LQ, LKV = 2, 8, 16          # batch, query len, key/value len
DIM, KV_DIM = 32, 16           # embed_dim (== dim), kv_dim
NUM_HEADS = 4
HEAD_DIM = DIM // NUM_HEADS
CONTEXT_LEN = 8                # context_length (>= LQ); learned_ape=True
LN_EPS = 1e-5


def cross_attention_kernel(xq_ref, xkv_ref, pos_ref,
                           wqt_ref, bq_ref, wkt_ref, bk_ref, wvt_ref, bv_ref,
                           wct_ref, bc_ref, gamma_ref, beta_ref, o_ref):
    # Whole batch in one invocation; rows are B*LQ (queries) and B*LKV (keys/values).
    xq = xq_ref[...] + pos_ref[...]           # (B*LQ, DIM)  learned APE (pre-tiled over batch)
    xkv = xkv_ref[...]                        # (B*LKV, KV_DIM)

    # Projections. Weights are pre-transposed host-side; 1/sqrt(HEAD_DIM) is folded into wq/bq,
    # matching F.multi_head_attention_forward's q = (x @ Wq^T + bq) * scale.
    q = jnp.dot(xq, wqt_ref[...], preferred_element_type=jnp.float32) + bq_ref[...]    # (B*LQ, DIM)
    k = jnp.dot(xkv, wkt_ref[...], preferred_element_type=jnp.float32) + bk_ref[...]   # (B*LKV, DIM)
    v = jnp.dot(xkv, wvt_ref[...], preferred_element_type=jnp.float32) + bv_ref[...]   # (B*LKV, DIM)

    # Head-batched attention: stack all (batch, head) pairs into one leading batch axis
    # so scores and P@V are single batched contractions and softmax runs once over all heads.
    q_bh = jnp.stack([q[b * LQ:(b + 1) * LQ, h * HEAD_DIM:(h + 1) * HEAD_DIM]
                      for b in range(B) for h in range(NUM_HEADS)])      # (B*H, LQ, HD)
    k_bh = jnp.stack([k[b * LKV:(b + 1) * LKV, h * HEAD_DIM:(h + 1) * HEAD_DIM]
                      for b in range(B) for h in range(NUM_HEADS)])      # (B*H, LKV, HD)
    v_bh = jnp.stack([v[b * LKV:(b + 1) * LKV, h * HEAD_DIM:(h + 1) * HEAD_DIM]
                      for b in range(B) for h in range(NUM_HEADS)])      # (B*H, LKV, HD)

    s = jnp.einsum('nqd,nkd->nqk', q_bh, k_bh,
                   preferred_element_type=jnp.float32)                   # (B*H, LQ, LKV)
    s = s - jnp.max(s, axis=-1, keepdims=True)
    p = jnp.exp(s)
    p = p * pl.reciprocal(jnp.sum(p, axis=-1, keepdims=True), approx=True)
    o_bh = jnp.einsum('nqk,nkd->nqd', p, v_bh,
                      preferred_element_type=jnp.float32)                # (B*H, LQ, HD)

    # Re-pack to (B*LQ, DIM): heads concatenated along lanes, batches along rows.
    attn = jnp.concatenate(
        [jnp.concatenate([o_bh[b * NUM_HEADS + h] for h in range(NUM_HEADS)], axis=-1)
         for b in range(B)],
        axis=0)                                                          # (B*LQ, DIM)

    # Output projection (c_proj) + LayerNorm (eps=1e-5, affine).
    y = jnp.dot(attn, wct_ref[...], preferred_element_type=jnp.float32) + bc_ref[...]
    mu = jnp.mean(y, axis=-1, keepdims=True)
    var = jnp.mean((y - mu) ** 2, axis=-1, keepdims=True)
    y = (y - mu) * jax.lax.rsqrt(var + LN_EPS) * gamma_ref[...] + beta_ref[...]

    o_ref[...] = y   # single (B*LQ, DIM) slab store


def cross_attention(x_q, x_kv, params):
    scale = 1.0 / (HEAD_DIM ** 0.5)
    # Host-side parameter prep (done once per call by XLA, keeps XLU transposes out of the kernel).
    pos = jnp.tile(params["pos"][:LQ], (B, 1))       # (B*LQ, DIM)
    wqt = (params["wq"] * scale).T                   # (DIM, DIM)   scale folded into wq
    bq = params["bq"] * scale                        # (1, DIM)     scale folded into bq
    wkt = params["wk"].T                             # (KV_DIM, DIM)
    wvt = params["wv"].T                             # (KV_DIM, DIM)
    wct = params["wc"].T                             # (DIM, DIM)

    xq2 = x_q.reshape(B * LQ, DIM)
    xkv2 = x_kv.reshape(B * LKV, KV_DIM)

    out2 = pl.pallas_call(
        cross_attention_kernel,
        out_shape=jax.ShapeDtypeStruct((B * LQ, DIM), jnp.float32),
        # No grid: one invocation over the whole (tiny) problem; all operands resident in VMEM.
    )(xq2, xkv2, pos,
      wqt, bq, wkt, params["bk"], wvt, params["bv"],
      wct, params["bc"], params["gamma"], params["beta"])
    return out2.reshape(B, LQ, DIM)


def cross_attention_ref(x_q, x_kv, params):
    """Pure-JAX reference (mirrors PyTorch F.multi_head_attention_forward semantics)."""
    pos = params["pos"][:LQ]
    xq = x_q + pos[None]                                     # (B, LQ, DIM)
    scale = 1.0 / (HEAD_DIM ** 0.5)
    q = (jnp.einsum("bld,ed->ble", xq, params["wq"]) + params["bq"]) * scale
    k = jnp.einsum("bld,ed->ble", x_kv, params["wk"]) + params["bk"]
    v = jnp.einsum("bld,ed->ble", x_kv, params["wv"]) + params["bv"]
    q = q.reshape(B, LQ, NUM_HEADS, HEAD_DIM)
    k = k.reshape(B, LKV, NUM_HEADS, HEAD_DIM)
    v = v.reshape(B, LKV, NUM_HEADS, HEAD_DIM)
    s = jnp.einsum("bqhd,bkhd->bhqk", q, k)
    p = jax.nn.softmax(s, axis=-1)
    o = jnp.einsum("bhqk,bkhd->bqhd", p, v).reshape(B, LQ, DIM)
    y = jnp.einsum("ble,de->bld", o, params["wc"]) + params["bc"]
    mu = jnp.mean(y, axis=-1, keepdims=True)
    var = jnp.mean((y - mu) ** 2, axis=-1, keepdims=True)
    return (y - mu) * jax.lax.rsqrt(var + LN_EPS) * params["gamma"] + params["beta"]


def make_params(key):
    ks = jax.random.split(key, 9)
    return {
        # nn.Parameter(torch.randn(context_length, embed_dim) / embed_dim ** 0.5)
        "pos": jax.random.normal(ks[0], (CONTEXT_LEN, DIM), jnp.float32) / (DIM ** 0.5),
        "wq": jax.random.normal(ks[1], (DIM, DIM), jnp.float32) * 0.05,
        "bq": jax.random.normal(ks[2], (1, DIM), jnp.float32) * 0.05,
        "wk": jax.random.normal(ks[3], (DIM, KV_DIM), jnp.float32) * 0.05,
        "bk": jax.random.normal(ks[4], (1, DIM), jnp.float32) * 0.05,
        "wv": jax.random.normal(ks[5], (DIM, KV_DIM), jnp.float32) * 0.05,
        "bv": jax.random.normal(ks[6], (1, DIM), jnp.float32) * 0.05,
        "wc": jax.random.normal(ks[7], (DIM, DIM), jnp.float32) * 0.05,
        "bc": jax.random.normal(ks[8], (1, DIM), jnp.float32) * 0.05,
        "gamma": jnp.ones((1, DIM), jnp.float32),
        "beta": jnp.zeros((1, DIM), jnp.float32),
    }


if __name__ == "__main__":
    key = jax.random.PRNGKey(0)
    k_params, k_q, k_kv = jax.random.split(key, 3)
    params = make_params(k_params)

    x_q = jax.random.normal(k_q, (B, LQ, DIM), jnp.float32)        # (batch, seq_q, dim)
    x_kv = jax.random.normal(k_kv, (B, LKV, KV_DIM), jnp.float32)  # (batch, seq_kv, kv_dim)

    out = jax.block_until_ready(cross_attention(x_q, x_kv, params))
    ref = jax.block_until_ready(cross_attention_ref(x_q, x_kv, params))
    np.testing.assert_allclose(np.asarray(out), np.asarray(ref), rtol=2e-2, atol=2e-3)

    print("KERNEL_OK")
</pallas_src>

<mosaic_0001>
module attributes {stable_mosaic.version = 11 : i64} {
  func.func @cross_attention_kernel(%arg0: memref<16x32xf32, #tpu.memory_space<vmem>>, %arg1: memref<32x16xf32, #tpu.memory_space<vmem>>, %arg2: memref<16x32xf32, #tpu.memory_space<vmem>>, %arg3: memref<32x32xf32, #tpu.memory_space<vmem>>, %arg4: memref<1x32xf32, #tpu.memory_space<vmem>>, %arg5: memref<16x32xf32, #tpu.memory_space<vmem>>, %arg6: memref<1x32xf32, #tpu.memory_space<vmem>>, %arg7: memref<16x32xf32, #tpu.memory_space<vmem>>, %arg8: memref<1x32xf32, #tpu.memory_space<vmem>>, %arg9: memref<32x32xf32, #tpu.memory_space<vmem>>, %arg10: memref<1x32xf32, #tpu.memory_space<vmem>>, %arg11: memref<1x32xf32, #tpu.memory_space<vmem>>, %arg12: memref<1x32xf32, #tpu.memory_space<vmem>>, %arg13: memref<16x32xf32, #tpu.memory_space<vmem>>) attributes {dimension_semantics = [], scalar_prefetch = 0 : i64, scratch_operands = 0 : i64, tpu.core_type = #tpu.core_type<tc>} {
    %c0 = arith.constant 0 : index
    %c0_0 = arith.constant 0 : index
    %0 = vector.load %arg0[%c0, %c0_0] : memref<16x32xf32, #tpu.memory_space<vmem>>, vector<16x32xf32>
    %c0_1 = arith.constant 0 : index
    %c0_2 = arith.constant 0 : index
    %1 = vector.load %arg2[%c0_1, %c0_2] : memref<16x32xf32, #tpu.memory_space<vmem>>, vector<16x32xf32>
    %2 = arith.addf %0, %1 : vector<16x32xf32>
    %c0_3 = arith.constant 0 : index
    %c0_4 = arith.constant 0 : index
    %3 = vector.load %arg1[%c0_3, %c0_4] : memref<32x16xf32, #tpu.memory_space<vmem>>, vector<32x16xf32>
    %c0_5 = arith.constant 0 : index
    %c0_6 = arith.constant 0 : index
    %4 = vector.load %arg3[%c0_5, %c0_6] : memref<32x32xf32, #tpu.memory_space<vmem>>, vector<32x32xf32>
    %cst = arith.constant dense<0.000000e+00> : vector<16x32xf32>
    %5 = tpu.matmul %2, %4, %cst {dimension_numbers = #tpu.dot_dimension_numbers<[1], [0], [0], [1], [0, 0, 1, 1], [], []>} : vector<16x32xf32>, vector<32x32xf32>, vector<16x32xf32> -> vector<16x32xf32>
    %c0_7 = arith.constant 0 : index
    %c0_8 = arith.constant 0 : index
    %6 = vector.load %arg4[%c0_7, %c0_8] : memref<1x32xf32, #tpu.memory_space<vmem>>, vector<1x32xf32>
    %7 = vector.broadcast %6 : vector<1x32xf32> to vector<16x32xf32>
    %8 = arith.addf %5, %7 : vector<16x32xf32>
    %c0_9 = arith.constant 0 : index
    %c0_10 = arith.constant 0 : index
    %9 = vector.load %arg5[%c0_9, %c0_10] : memref<16x32xf32, #tpu.memory_space<vmem>>, vector<16x32xf32>
    %cst_11 = arith.constant dense<0.000000e+00> : vector<32x32xf32>
    %10 = tpu.matmul %3, %9, %cst_11 {dimension_numbers = #tpu.dot_dimension_numbers<[1], [0], [0], [1], [0, 0, 1, 1], [], []>} : vector<32x16xf32>, vector<16x32xf32>, vector<32x32xf32> -> vector<32x32xf32>
    %c0_12 = arith.constant 0 : index
    %c0_13 = arith.constant 0 : index
    %11 = vector.load %arg6[%c0_12, %c0_13] : memref<1x32xf32, #tpu.memory_space<vmem>>, vector<1x32xf32>
    %12 = vector.broadcast %11 : vector<1x32xf32> to vector<32x32xf32>
    %13 = arith.addf %10, %12 : vector<32x32xf32>
    %c0_14 = arith.constant 0 : index
    %c0_15 = arith.constant 0 : index
    %14 = vector.load %arg7[%c0_14, %c0_15] : memref<16x32xf32, #tpu.memory_space<vmem>>, vector<16x32xf32>
    %cst_16 = arith.constant dense<0.000000e+00> : vector<32x32xf32>
    %15 = tpu.matmul %3, %14, %cst_16 {dimension_numbers = #tpu.dot_dimension_numbers<[1], [0], [0], [1], [0, 0, 1, 1], [], []>} : vector<32x16xf32>, vector<16x32xf32>, vector<32x32xf32> -> vector<32x32xf32>
    %c0_17 = arith.constant 0 : index
    %c0_18 = arith.constant 0 : index
    %16 = vector.load %arg8[%c0_17, %c0_18] : memref<1x32xf32, #tpu.memory_space<vmem>>, vector<1x32xf32>
    %17 = vector.broadcast %16 : vector<1x32xf32> to vector<32x32xf32>
    %18 = arith.addf %15, %17 : vector<32x32xf32>
    %19 = vector.extract_strided_slice %8 {offsets = [0, 0], sizes = [8, 8], strides = [1, 1]} : vector<16x32xf32> to vector<8x8xf32>
    %20 = vector.extract_strided_slice %8 {offsets = [0, 8], sizes = [8, 8], strides = [1, 1]} : vector<16x32xf32> to vector<8x8xf32>
    %21 = vector.extract_strided_slice %8 {offsets = [0, 16], sizes = [8, 8], strides = [1, 1]} : vector<16x32xf32> to vector<8x8xf32>
    %22 = vector.extract_strided_slice %8 {offsets = [0, 24], sizes = [8, 8], strides = [1, 1]} : vector<16x32xf32> to vector<8x8xf32>
    %23 = vector.extract_strided_slice %8 {offsets = [8, 0], sizes = [8, 8], strides = [1, 1]} : vector<16x32xf32> to vector<8x8xf32>
    %24 = vector.extract_strided_slice %8 {offsets = [8, 8], sizes = [8, 8], strides = [1, 1]} : vector<16x32xf32> to vector<8x8xf32>
    %25 = vector.extract_strided_slice %8 {offsets = [8, 16], sizes = [8, 8], strides = [1, 1]} : vector<16x32xf32> to vector<8x8xf32>
    %26 = vector.extract_strided_slice %8 {offsets = [8, 24], sizes = [8, 8], strides = [1, 1]} : vector<16x32xf32> to vector<8x8xf32>
    %27 = vector.shape_cast %19 : vector<8x8xf32> to vector<1x8x8xf32>
    %28 = vector.shape_cast %20 : vector<8x8xf32> to vector<1x8x8xf32>
    %29 = vector.shape_cast %21 : vector<8x8xf32> to vector<1x8x8xf32>
    %30 = vector.shape_cast %22 : vector<8x8xf32> to vector<1x8x8xf32>
    %31 = vector.shape_cast %23 : vector<8x8xf32> to vector<1x8x8xf32>
    %32 = vector.shape_cast %24 : vector<8x8xf32> to vector<1x8x8xf32>
    %33 = vector.shape_cast %25 : vector<8x8xf32> to vector<1x8x8xf32>
    %34 = vector.shape_cast %26 : vector<8x8xf32> to vector<1x8x8xf32>
    %35 = tpu.concatenate %27, %28, %29, %30, %31, %32, %33, %34 in 0 : vector<1x8x8xf32>, vector<1x8x8xf32>, vector<1x8x8xf32>, vector<1x8x8xf32>, vector<1x8x8xf32>, vector<1x8x8xf32>, vector<1x8x8xf32>, vector<1x8x8xf32> -> vector<8x8x8xf32>
    %36 = vector.extract_strided_slice %13 {offsets = [0, 0], sizes = [16, 8], strides = [1, 1]} : vector<32x32xf32> to vector<16x8xf32>
    %37 = vector.extract_strided_slice %13 {offsets = [0, 8], sizes = [16, 8], strides = [1, 1]} : vector<32x32xf32> to vector<16x8xf32>
    %38 = vector.extract_strided_slice %13 {offsets = [0, 16], sizes = [16, 8], strides = [1, 1]} : vector<32x32xf32> to vector<16x8xf32>
    %39 = vector.extract_strided_slice %13 {offsets = [0, 24], sizes = [16, 8], strides = [1, 1]} : vector<32x32xf32> to vector<16x8xf32>
    %40 = vector.extract_strided_slice %13 {offsets = [16, 0], sizes = [16, 8], strides = [1, 1]} : vector<32x32xf32> to vector<16x8xf32>
    %41 = vector.extract_strided_slice %13 {offsets = [16, 8], sizes = [16, 8], strides = [1, 1]} : vector<32x32xf32> to vector<16x8xf32>
    %42 = vector.extract_strided_slice %13 {offsets = [16, 16], sizes = [16, 8], strides = [1, 1]} : vector<32x32xf32> to vector<16x8xf32>
    %43 = vector.extract_strided_slice %13 {offsets = [16, 24], sizes = [16, 8], strides = [1, 1]} : vector<32x32xf32> to vector<16x8xf32>
    %44 = vector.shape_cast %36 : vector<16x8xf32> to vector<1x16x8xf32>
    %45 = vector.shape_cast %37 : vector<16x8xf32> to vector<1x16x8xf32>
    %46 = vector.shape_cast %38 : vector<16x8xf32> to vector<1x16x8xf32>
    %47 = vector.shape_cast %39 : vector<16x8xf32> to vector<1x16x8xf32>
    %48 = vector.shape_cast %40 : vector<16x8xf32> to vector<1x16x8xf32>
    %49 = vector.shape_cast %41 : vector<16x8xf32> to vector<1x16x8xf32>
    %50 = vector.shape_cast %42 : vector<16x8xf32> to vector<1x16x8xf32>
    %51 = vector.shape_cast %43 : vector<16x8xf32> to vector<1x16x8xf32>
    %52 = tpu.concatenate %44, %45, %46, %47, %48, %49, %50, %51 in 0 : vector<1x16x8xf32>, vector<1x16x8xf32>, vector<1x16x8xf32>, vector<1x16x8xf32>, vector<1x16x8xf32>, vector<1x16x8xf32>, vector<1x16x8xf32>, vector<1x16x8xf32> -> vector<8x16x8xf32>
    %53 = vector.extract_strided_slice %18 {offsets = [0, 0], sizes = [16, 8], strides = [1, 1]} : vector<32x32xf32> to vector<16x8xf32>
    %54 = vector.extract_strided_slice %18 {offsets = [0, 8], sizes = [16, 8], strides = [1, 1]} : vector<32x32xf32> to vector<16x8xf32>
    %55 = vector.extract_strided_slice %18 {offsets = [0, 16], sizes = [16, 8], strides = [1, 1]} : vector<32x32xf32> to vector<16x8xf32>
    %56 = vector.extract_strided_slice %18 {offsets = [0, 24], sizes = [16, 8], strides = [1, 1]} : vector<32x32xf32> to vector<16x8xf32>
    %57 = vector.extract_strided_slice %18 {offsets = [16, 0], sizes = [16, 8], strides = [1, 1]} : vector<32x32xf32> to vector<16x8xf32>
    %58 = vector.extract_strided_slice %18 {offsets = [16, 8], sizes = [16, 8], strides = [1, 1]} : vector<32x32xf32> to vector<16x8xf32>
    %59 = vector.extract_strided_slice %18 {offsets = [16, 16], sizes = [16, 8], strides = [1, 1]} : vector<32x32xf32> to vector<16x8xf32>
    %60 = vector.extract_strided_slice %18 {offsets = [16, 24], sizes = [16, 8], strides = [1, 1]} : vector<32x32xf32> to vector<16x8xf32>
    %61 = vector.shape_cast %53 : vector<16x8xf32> to vector<1x16x8xf32>
    %62 = vector.shape_cast %54 : vector<16x8xf32> to vector<1x16x8xf32>
    %63 = vector.shape_cast %55 : vector<16x8xf32> to vector<1x16x8xf32>
    %64 = vector.shape_cast %56 : vector<16x8xf32> to vector<1x16x8xf32>
    %65 = vector.shape_cast %57 : vector<16x8xf32> to vector<1x16x8xf32>
    %66 = vector.shape_cast %58 : vector<16x8xf32> to vector<1x16x8xf32>
    %67 = vector.shape_cast %59 : vector<16x8xf32> to vector<1x16x8xf32>
    %68 = vector.shape_cast %60 : vector<16x8xf32> to vector<1x16x8xf32>
    %69 = tpu.concatenate %61, %62, %63, %64, %65, %66, %67, %68 in 0 : vector<1x16x8xf32>, vector<1x16x8xf32>, vector<1x16x8xf32>, vector<1x16x8xf32>, vector<1x16x8xf32>, vector<1x16x8xf32>, vector<1x16x8xf32>, vector<1x16x8xf32> -> vector<8x16x8xf32>
    "tpu.trace_start"() <{level = 10 : i32, message = "nqd,nkd->nqk"}> : () -> ()
    %cst_19 = arith.constant dense<0.000000e+00> : vector<8x8x16xf32>
    %70 = tpu.matmul %35, %52, %cst_19 {dimension_numbers = #tpu.dot_dimension_numbers<[2], [2], [1], [1], [0, 0, 0, 1, 1, 1], [0], [0]>} : vector<8x8x8xf32>, vector<8x16x8xf32>, vector<8x8x16xf32> -> vector<8x8x16xf32>
    "tpu.trace_stop"() : () -> ()
    %cst_20 = arith.constant dense<0xFF800000> : vector<8x8xf32>
    %71 = vector.multi_reduction <maximumf>, %70, %cst_20 [2] : vector<8x8x16xf32> to vector<8x8xf32>
    %72 = vector.shape_cast %71 : vector<8x8xf32> to vector<8x8x1xf32>
    %73 = vector.broadcast %72 : vector<8x8x1xf32> to vector<8x8x16xf32>
    %74 = arith.subf %70, %73 : vector<8x8x16xf32>
    %75 = math.exp %74 : vector<8x8x16xf32>
    %cst_21 = arith.constant dense<0.000000e+00> : vector<8x8xf32>
    %76 = vector.multi_reduction <add>, %75, %cst_21 [2] : vector<8x8x16xf32> to vector<8x8xf32>
    %77 = vector.shape_cast %76 : vector<8x8xf32> to vector<8x8x1xf32>
    %78 = tpu.reciprocal %77 {approx = true} : vector<8x8x1xf32> -> vector<8x8x1xf32>
    %79 = vector.broadcast %78 : vector<8x8x1xf32> to vector<8x8x16xf32>
    %80 = arith.mulf %75, %79 : vector<8x8x16xf32>
    "tpu.trace_start"() <{level = 10 : i32, message = "nqk,nkd->nqd"}> : () -> ()
    %cst_22 = arith.constant dense<0.000000e+00> : vector<8x8x8xf32>
    %81 = tpu.matmul %80, %69, %cst_22 {dimension_numbers = #tpu.dot_dimension_numbers<[2], [1], [1], [2], [0, 0, 0, 1, 1, 2], [0], [0]>} : vector<8x8x16xf32>, vector<8x16x8xf32>, vector<8x8x8xf32> -> vector<8x8x8xf32>
    "tpu.trace_stop"() : () -> ()
    %82 = vector.extract_strided_slice %81 {offsets = [0, 0, 0], sizes = [1, 8, 8], strides = [1, 1, 1]} : vector<8x8x8xf32> to vector<1x8x8xf32>
    %83 = vector.shape_cast %82 : vector<1x8x8xf32> to vector<8x8xf32>
    %84 = vector.extract_strided_slice %81 {offsets = [1, 0, 0], sizes = [1, 8, 8], strides = [1, 1, 1]} : vector<8x8x8xf32> to vector<1x8x8xf32>
    %85 = vector.shape_cast %84 : vector<1x8x8xf32> to vector<8x8xf32>
    %86 = vector.extract_strided_slice %81 {offsets = [2, 0, 0], sizes = [1, 8, 8], strides = [1, 1, 1]} : vector<8x8x8xf32> to vector<1x8x8xf32>
    %87 = vector.shape_cast %86 : vector<1x8x8xf32> to vector<8x8xf32>
    %88 = vector.extract_strided_slice %81 {offsets = [3, 0, 0], sizes = [1, 8, 8], strides = [1, 1, 1]} : vector<8x8x8xf32> to vector<1x8x8xf32>
    %89 = vector.shape_cast %88 : vector<1x8x8xf32> to vector<8x8xf32>
    %90 = tpu.concatenate %83, %85, %87, %89 in 1 : vector<8x8xf32>, vector<8x8xf32>, vector<8x8xf32>, vector<8x8xf32> -> vector<8x32xf32>
    %91 = vector.extract_strided_slice %81 {offsets = [4, 0, 0], sizes = [1, 8, 8], strides = [1, 1, 1]} : vector<8x8x8xf32> to vector<1x8x8xf32>
    %92 = vector.shape_cast %91 : vector<1x8x8xf32> to vector<8x8xf32>
    %93 = vector.extract_strided_slice %81 {offsets = [5, 0, 0], sizes = [1, 8, 8], strides = [1, 1, 1]} : vector<8x8x8xf32> to vector<1x8x8xf32>
    %94 = vector.shape_cast %93 : vector<1x8x8xf32> to vector<8x8xf32>
    %95 = vector.extract_strided_slice %81 {offsets = [6, 0, 0], sizes = [1, 8, 8], strides = [1, 1, 1]} : vector<8x8x8xf32> to vector<1x8x8xf32>
    %96 = vector.shape_cast %95 : vector<1x8x8xf32> to vector<8x8xf32>
    %97 = vector.extract_strided_slice %81 {offsets = [7, 0, 0], sizes = [1, 8, 8], strides = [1, 1, 1]} : vector<8x8x8xf32> to vector<1x8x8xf32>
    %98 = vector.shape_cast %97 : vector<1x8x8xf32> to vector<8x8xf32>
    %99 = tpu.concatenate %92, %94, %96, %98 in 1 : vector<8x8xf32>, vector<8x8xf32>, vector<8x8xf32>, vector<8x8xf32> -> vector<8x32xf32>
    %100 = tpu.concatenate %90, %99 in 0 : vector<8x32xf32>, vector<8x32xf32> -> vector<16x32xf32>
    %c0_23 = arith.constant 0 : index
    %c0_24 = arith.constant 0 : index
    %101 = vector.load %arg9[%c0_23, %c0_24] : memref<32x32xf32, #tpu.memory_space<vmem>>, vector<32x32xf32>
    %cst_25 = arith.constant dense<0.000000e+00> : vector<16x32xf32>
    %102 = tpu.matmul %100, %101, %cst_25 {dimension_numbers = #tpu.dot_dimension_numbers<[1], [0], [0], [1], [0, 0, 1, 1], [], []>} : vector<16x32xf32>, vector<32x32xf32>, vector<16x32xf32> -> vector<16x32xf32>
    %c0_26 = arith.constant 0 : index
    %c0_27 = arith.constant 0 : index
    %103 = vector.load %arg10[%c0_26, %c0_27] : memref<1x32xf32, #tpu.memory_space<vmem>>, vector<1x32xf32>
    %104 = vector.broadcast %103 : vector<1x32xf32> to vector<16x32xf32>
    %105 = arith.addf %102, %104 : vector<16x32xf32>
    %cst_28 = arith.constant dense<0.000000e+00> : vector<16xf32>
    %106 = vector.multi_reduction <add>, %105, %cst_28 [1] : vector<16x32xf32> to vector<16xf32>
    %107 = vector.shape_cast %106 : vector<16xf32> to vector<16x1xf32>
    %cst_29 = arith.constant 3.200000e+01 : f32
    %108 = vector.broadcast %cst_29 : f32 to vector<16x1xf32>
    %109 = arith.divf %107, %108 : vector<16x1xf32>
    %110 = vector.broadcast %109 : vector<16x1xf32> to vector<16x32xf32>
    %111 = arith.subf %105, %110 : vector<16x32xf32>
    %112 = arith.mulf %111, %111 : vector<16x32xf32>
    %cst_30 = arith.constant dense<0.000000e+00> : vector<16xf32>
    %113 = vector.multi_reduction <add>, %112, %cst_30 [1] : vector<16x32xf32> to vector<16xf32>
    %114 = vector.shape_cast %113 : vector<16xf32> to vector<16x1xf32>
    %cst_31 = arith.constant 3.200000e+01 : f32
    %115 = vector.broadcast %cst_31 : f32 to vector<16x1xf32>
    %116 = arith.divf %114, %115 : vector<16x1xf32>
    %117 = vector.broadcast %109 : vector<16x1xf32> to vector<16x32xf32>
    %118 = arith.subf %105, %117 : vector<16x32xf32>
    %cst_32 = arith.constant 9.99999974E-6 : f32
    %119 = vector.broadcast %cst_32 : f32 to vector<16x1xf32>
    %120 = arith.addf %116, %119 : vector<16x1xf32>
    %121 = math.rsqrt %120 : vector<16x1xf32>
    %122 = vector.broadcast %121 : vector<16x1xf32> to vector<16x32xf32>
    %123 = arith.mulf %118, %122 : vector<16x32xf32>
    %c0_33 = arith.constant 0 : index
    %c0_34 = arith.constant 0 : index
    %124 = vector.load %arg11[%c0_33, %c0_34] : memref<1x32xf32, #tpu.memory_space<vmem>>, vector<1x32xf32>
    %125 = vector.broadcast %124 : vector<1x32xf32> to vector<16x32xf32>
    %126 = arith.mulf %123, %125 : vector<16x32xf32>
    %c0_35 = arith.constant 0 : index
    %c0_36 = arith.constant 0 : index
    %127 = vector.load %arg12[%c0_35, %c0_36] : memref<1x32xf32, #tpu.memory_space<vmem>>, vector<1x32xf32>
    %128 = vector.broadcast %127 : vector<1x32xf32> to vector<16x32xf32>
    %129 = arith.addf %126, %128 : vector<16x32xf32>
    %c0_37 = arith.constant 0 : index
    %c0_38 = arith.constant 0 : index
    %130 = vector.load %arg13[%c0_37, %c0_38] : memref<16x32xf32, #tpu.memory_space<vmem>>, vector<16x32xf32>
    tpu.vector_store %arg13[%c0_37, %c0_38], %129 {strides = array<i32>} : memref<16x32xf32, #tpu.memory_space<vmem>>, vector<16x32xf32>,
    return
  }
}

</mosaic_0001>

<llo_original>
// kernel: tpu_custom_call.1
$region0: #{tpu_custom_call.1}
  #allocation0 [shape = 'u32[]', space=smem, size = 0x4, offset = 0x4, fixed_abs, tag = 'smem constant byte address 0x4 - core index']
  #allocation1 [shape = 'u32[72,128]{1,0:T(1,128)}', space=vmem, size = 0x9000, scoped, tag = 'internal scratch']
  %s0 = inlined_call_operand.vmem [shape: f32[16,32], index: 0, kind: input, shape index: {}]
  %s1 = inlined_call_operand.vmem [shape: f32[32,16], index: 1, kind: input, shape index: {}]
  %s2 = inlined_call_operand.hbm [shape: f32[16,32], index: 2, kind: input, shape index: {}]
  %s3 = inlined_call_operand.vmem [shape: f32[32,32], index: 3, kind: input, shape index: {}]
  %s4 = inlined_call_operand.vmem [shape: f32[1,32], index: 4, kind: input, shape index: {}]
  %s5 = inlined_call_operand.hbm [shape: f32[16,32], index: 5, kind: input, shape index: {}]
  %s6 = inlined_call_operand.vmem [shape: f32[1,32], index: 6, kind: input, shape index: {}]
  %s7 = inlined_call_operand.hbm [shape: f32[16,32], index: 7, kind: input, shape index: {}]
  %s8 = inlined_call_operand.vmem [shape: f32[1,32], index: 8, kind: input, shape index: {}]
  %s9 = inlined_call_operand.hbm [shape: f32[32,32], index: 9, kind: input, shape index: {}]
  %s10 = inlined_call_operand.vmem [shape: f32[1,32], index: 10, kind: input, shape index: {}]
  %s11 = inlined_call_operand.vmem [shape: f32[1,32], index: 11, kind: input, shape index: {}]
  %s12 = inlined_call_operand.vmem [shape: f32[1,32], index: 12, kind: input, shape index: {}]
  %s13 = inlined_call_operand.hbm [shape: f32[16,32], index: 13, kind: output, shape index: {}]
  %s14 = sld [smem:[#allocation0]]
  $region78: #{tpu_custom_call.1} parent=0
    _
  %s16 = ssub.s32 1, %s14
  %s17 = scalar_select 0, %s16, %s14
  $region1: #{tpu_custom_call.1} parent=0
    #allocation2 [shape = 'u8[8192]{0}', space=vmem, size = 0x2000, scoped, tag = 'input window, operand 2, single buffered']
    #allocation3 [shape = 's32[1]{0}', space=sflag, size = 0x4, scoped, tag = 'scoped memory for tpu_custom_call.1']
    #allocation4 [shape = 's32[1]{0}', space=sflag, size = 0x4, scoped, tag = 'scoped memory for tpu_custom_call.1']
    #allocation5 [shape = 'u8[8192]{0}', space=vmem, size = 0x2000, scoped, tag = 'input window, operand 5, single buffered']
    #allocation6 [shape = 's32[1]{0}', space=sflag, size = 0x4, scoped, tag = 'scoped memory for tpu_custom_call.1']
    #allocation7 [shape = 'u8[8192]{0}', space=vmem, size = 0x2000, scoped, tag = 'input window, operand 7, single buffered']
    #allocation8 [shape = 'u8[16384]{0}', space=vmem, size = 0x4000, scoped, tag = 'input window, operand 9, single buffered']
    #allocation9 [shape = 's32[1]{0}', space=sflag, size = 0x4, scoped, tag = 'scoped memory for tpu_custom_call.1']
    #allocation10 [shape = 'u8[8192]{0}', space=vmem, size = 0x2000, scoped, tag = 'output window, operand 0, single buffered']
    %18 = vsyncpa [#allocation3], 0
    %19 = vsyncpa [#allocation6], 0
    %20 = vsyncpa [#allocation9], 0
    %21 = vsyncpa [#allocation4], 0
    // Predicated region
    $region2: #{tpu_custom_call.1} parent=1 // pred_check
      _
    $region3: #{tpu_custom_call.1} parent=1 // pred_check_branch
      %23 = sbr.rel (0) target = $region5
    $region4: #{tpu_custom_call.1} parent=1 // pred_region
      _
    $region5: #{tpu_custom_call.1} parent=1 // pred_fallthru
      _
    // Predicated region
    $region6: #{tpu_custom_call.1} parent=1 // pred_check
      _
    $region7: #{tpu_custom_call.1} parent=1 // pred_check_branch
      %25 = sbr.rel (0) target = $region9
    $region8: #{tpu_custom_call.1} parent=1 // pred_region
      _
    $region9: #{tpu_custom_call.1} parent=1 // pred_fallthru
      _
    // Predicated region
    $region10: #{tpu_custom_call.1} parent=1 // pred_check
      _
    $region11: #{tpu_custom_call.1} parent=1 // pred_check_branch
      %27 = sbr.rel (0) target = $region13
    $region12: #{tpu_custom_call.1} parent=1 // pred_region
      %29 = vsyncadd [#allocation3], 0
      %s30 = sshll.u32 %s2, 4
      %s31 = int_to_ptr.hbm [resolvable:$true] %s30
      %s32 = sshll.u32 [#allocation2], 4
      %s33 = int_to_ptr.vmem [resolvable:$true] %s32
      %38 = dma.hbm_to_vmem [thread:$0]  %s31, 256, %s33, [#allocation3], 128, 128, 8
    $region13: #{tpu_custom_call.1} parent=1 // pred_fallthru
      _
    // Predicated region
    $region14: #{tpu_custom_call.1} parent=1 // pred_check
      _
    $region15: #{tpu_custom_call.1} parent=1 // pred_check_branch
      %40 = sbr.rel (0) target = $region17
    $region16: #{tpu_custom_call.1} parent=1 // pred_region
      _
    $region17: #{tpu_custom_call.1} parent=1 // pred_fallthru
      _
    // Predicated region
    $region18: #{tpu_custom_call.1} parent=1 // pred_check
      _
    $region19: #{tpu_custom_call.1} parent=1 // pred_check_branch
      %42 = sbr.rel (0) target = $region21
    $region20: #{tpu_custom_call.1} parent=1 // pred_region
      _
    $region21: #{tpu_custom_call.1} parent=1 // pred_fallthru
      _
    // Predicated region
    $region22: #{tpu_custom_call.1} parent=1 // pred_check
      _
    $region23: #{tpu_custom_call.1} parent=1 // pred_check_branch
      %44 = sbr.rel (0) target = $region25
    $region24: #{tpu_custom_call.1} parent=1 // pred_region
      %46 = vsyncadd [#allocation6], 0
      %s47 = sshll.u32 %s5, 4
      %s48 = int_to_ptr.hbm [resolvable:$true] %s47
      %s49 = sshll.u32 [#allocation5], 4
      %s50 = int_to_ptr.vmem [resolvable:$true] %s49
      %55 = dma.hbm_to_vmem [thread:$0]  %s48, 256, %s50, [#allocation6], 128, 128, 8
    $region25: #{tpu_custom_call.1} parent=1 // pred_fallthru
      _
    // Predicated region
    $region26: #{tpu_custom_call.1} parent=1 // pred_check
      _
    $region27: #{tpu_custom_call.1} parent=1 // pred_check_branch
      %57 = sbr.rel (0) target = $region29
    $region28: #{tpu_custom_call.1} parent=1 // pred_region
      _
    $region29: #{tpu_custom_call.1} parent=1 // pred_fallthru
      _
    // Predicated region
    $region30: #{tpu_custom_call.1} parent=1 // pred_check
      _
    $region31: #{tpu_custom_call.1} parent=1 // pred_check_branch
      %59 = sbr.rel (0) target = $region33
    $region32: #{tpu_custom_call.1} parent=1 // pred_region
      %61 = vsyncadd [#allocation6], 0
      %s62 = sshll.u32 %s7, 4
      %s63 = int_to_ptr.hbm [resolvable:$true] %s62
      %s64 = sshll.u32 [#allocation7], 4
      %s65 = int_to_ptr.vmem [resolvable:$true] %s64
      %70 = dma.hbm_to_vmem [thread:$0]  %s63, 256, %s65, [#allocation6], 128, 128, 8
    $region33: #{tpu_custom_call.1} parent=1 // pred_fallthru
      _
    // Predicated region
    $region34: #{tpu_custom_call.1} parent=1 // pred_check
      _
    $region35: #{tpu_custom_call.1} parent=1 // pred_check_branch
      %72 = sbr.rel (0) target = $region37
    $region36: #{tpu_custom_call.1} parent=1 // pred_region
      _
    $region37: #{tpu_custom_call.1} parent=1 // pred_fallthru
      _
    // Predicated region
    $region38: #{tpu_custom_call.1} parent=1 // pred_check
      _
    $region39: #{tpu_custom_call.1} parent=1 // pred_check_branch
      %74 = sbr.rel (0) target = $region41
    $region40: #{tpu_custom_call.1} parent=1 // pred_region
      %76 = vsyncadd [#allocation9], 0
      %s77 = sshll.u32 %s9, 4
      %s78 = int_to_ptr.hbm [resolvable:$true] %s77
      %s79 = sshll.u32 [#allocation8], 4
      %s80 = int_to_ptr.vmem [resolvable:$true] %s79
      %85 = dma.hbm_to_vmem [thread:$0]  %s78, 512, %s80, [#allocation9], 128, 128, 8
    $region41: #{tpu_custom_call.1} parent=1 // pred_fallthru
      _
    // Predicated region
    $region42: #{tpu_custom_call.1} parent=1 // pred_check
      _
    $region43: #{tpu_custom_call.1} parent=1 // pred_check_branch
      %87 = sbr.rel (0) target = $region45
    $region44: #{tpu_custom_call.1} parent=1 // pred_region
      _
    $region45: #{tpu_custom_call.1} parent=1 // pred_fallthru
      _
    // Predicated region
    $region46: #{tpu_custom_call.1} parent=1 // pred_check
      _
    $region47: #{tpu_custom_call.1} parent=1 // pred_check_branch
      %89 = sbr.rel (0) target = $region49
    $region48: #{tpu_custom_call.1} parent=1 // pred_region
      _
    $region49: #{tpu_custom_call.1} parent=1 // pred_fallthru
      _
    // Predicated region
    $region50: #{tpu_custom_call.1} parent=1 // pred_check
      _
    $region51: #{tpu_custom_call.1} parent=1 // pred_check_branch
      %91 = sbr.rel (0) target = $region53
    $region52: #{tpu_custom_call.1} parent=1 // pred_region
      _
    $region53: #{tpu_custom_call.1} parent=1 // pred_fallthru
      _
    // Predicated region
    $region54: #{tpu_custom_call.1} parent=1 // pred_check
      _
    $region55: #{tpu_custom_call.1} parent=1 // pred_check_branch
      %93 = sbr.rel (0) target = $region57
    $region56: #{tpu_custom_call.1} parent=1 // pred_region
      %95 = dma.done [#allocation3], 256
    $region57: #{tpu_custom_call.1} parent=1 // pred_fallthru
      _
    // Predicated region
    $region58: #{tpu_custom_call.1} parent=1 // pred_check
      _
    $region59: #{tpu_custom_call.1} parent=1 // pred_check_branch
      %97 = sbr.rel (0) target = $region61
    $region60: #{tpu_custom_call.1} parent=1 // pred_region
      %99 = dma.done [#allocation6], 256
    $region61: #{tpu_custom_call.1} parent=1 // pred_fallthru
      _
    // Predicated region
    $region62: #{tpu_custom_call.1} parent=1 // pred_check
      _
    $region63: #{tpu_custom_call.1} parent=1 // pred_check_branch
      %101 = sbr.rel (0) target = $region65
    $region64: #{tpu_custom_call.1} parent=1 // pred_region
      %103 = dma.done [#allocation6], 256
    $region65: #{tpu_custom_call.1} parent=1 // pred_fallthru
      _
    // Predicated region
    $region66: #{tpu_custom_call.1} parent=1 // pred_check
      _
    $region67: #{tpu_custom_call.1} parent=1 // pred_check_branch
      %105 = sbr.rel (0) target = $region69
    $region68: #{tpu_custom_call.1} parent=1 // pred_region
      %107 = dma.done [#allocation9], 512
    $region69: #{tpu_custom_call.1} parent=1 // pred_fallthru
      _
    %v108 = vld [vmem:[%s0] sm:$0xff]
    %v109 = vld [vmem:[%s0 + $0x8] sm:$0xff]
    %v110 = vld [vmem:[#allocation2] sm:$0xff]
    %v111 = vld [vmem:[#allocation2 + $0x8] sm:$0xff]
    %v112 = vadd.f32 %v108, %v110
    %v113 = vadd.f32 %v109, %v111
    %v114 = vld [vmem:[%s1] sm:$0xff]
    %v115 = vld [vmem:[%s1 + $0x8] sm:$0xff]
    %v116 = vld [vmem:[%s1 + $0x10] sm:$0xff]
    %v117 = vld [vmem:[%s1 + $0x18] sm:$0xff]
    %v118 = vld [vmem:[%s3] sm:$0xff]
    %v119 = vld [vmem:[%s3 + $0x8] sm:$0xff]
    %v120 = vld [vmem:[%s3 + $0x10] sm:$0xff]
    %v121 = vld [vmem:[%s3 + $0x18] sm:$0xff]
    %v122 = vld [vmem:[%s4] sm:$0x1]
    %v124 = vperm.slane %v122, 0
    %vm126 = vcmask 261120
    %v128 = vsel %vm126, %v112, 0
    %v131 = vsel %vm126, %v113, 0
    %133 = vmatpush.msra.mxu0 0.0
    %134 = vmatpush.msra.mxu0 0.0
    %135 = vmatpush.msra.mxu0 0.0
    %136 = vmatpush.msra.mxu0 0.0
    %137 = vmatpush.msra.mxu0 0.0
    %138 = vmatpush.msra.mxu0 0.0
    %139 = vmatpush.msra.mxu0 0.0
    %140 = vmatpush.msra.mxu0 0.0
    %141 = vmatpush.msra.mxu0 0.0
    %142 = vmatpush.msra.mxu0 0.0
    %143 = vmatpush.msra.mxu0 0.0
    %144 = vmatpush.msra.mxu0 0.0
    %145 = vmatpush.msra.mxu0 %v121
    %146 = vmatpush.msra.mxu0 %v120
    %147 = vmatpush.msra.mxu0 %v119
    %148 = vmatpush.msra.mxu0 %v118
    %149 = vmatmul.f32.gmra.mxu0 %v128
    %v150 = vpop.f32.mrf.mxu0
    %v151 = vadd.f32 %v124, %v150
    %152 = vmatmul.f32.gmra.mxu0 %v131
    %v153 = vpop.f32.mrf.mxu0
    %v154 = vadd.f32 %v124, %v153
    %155 = vdwg.mxu0
    %v156 = vld [vmem:[#allocation5] sm:$0xff]
    %v157 = vld [vmem:[#allocation5 + $0x8] sm:$0xff]
    %v158 = vld [vmem:[%s6] sm:$0x1]
    %v160 = vperm.slane %v158, 0
    %vm162 = vcmask 130048
    %v164 = vsel %vm162, %v114, 0
    %v167 = vsel %vm162, %v115, 0
    %v170 = vsel %vm162, %v116, 0
    %v173 = vsel %vm162, %v117, 0
    %175 = vmatpush.msra.mxu0 0.0
    %176 = vmatpush.msra.mxu0 0.0
    %177 = vmatpush.msra.mxu0 0.0
    %178 = vmatpush.msra.mxu0 0.0
    %179 = vmatpush.msra.mxu0 0.0
    %180 = vmatpush.msra.mxu0 0.0
    %181 = vmatpush.msra.mxu0 0.0
    %182 = vmatpush.msra.mxu0 0.0
    %183 = vmatpush.msra.mxu0 0.0
    %184 = vmatpush.msra.mxu0 0.0
    %185 = vmatpush.msra.mxu0 0.0
    %186 = vmatpush.msra.mxu0 0.0
    %187 = vmatpush.msra.mxu0 0.0
    %188 = vmatpush.msra.mxu0 0.0
    %189 = vmatpush.msra.mxu0 %v157
    %190 = vmatpush.msra.mxu0 %v156
    %191 = vmatmul.f32.gmra.mxu0 %v164
    %v192 = vpop.f32.mrf.mxu0
    %v193 = vadd.f32 %v160, %v192
    %194 = vmatmul.f32.gmra.mxu0 %v167
    %v195 = vpop.f32.mrf.mxu0
    %v196 = vadd.f32 %v160, %v195
    %197 = vmatmul.f32.gmra.mxu0 %v170
    %v198 = vpop.f32.mrf.mxu0
    %v199 = vadd.f32 %v160, %v198
    %200 = vmatmul.f32.gmra.mxu0 %v173
    %v201 = vpop.f32.mrf.mxu0
    %v202 = vadd.f32 %v160, %v201
    %203 = vdwg.mxu0
    %v204 = vld [vmem:[#allocation7] sm:$0xff]
    %v205 = vld [vmem:[#allocation7 + $0x8] sm:$0xff]
    %v206 = vld [vmem:[%s8] sm:$0x1]
    %v208 = vperm.slane %v206, 0
    %210 = vmatpush.msra.mxu0 0.0
    %211 = vmatpush.msra.mxu0 0.0
    %212 = vmatpush.msra.mxu0 0.0
    %213 = vmatpush.msra.mxu0 0.0
    %214 = vmatpush.msra.mxu0 0.0
    %215 = vmatpush.msra.mxu0 0.0
    %216 = vmatpush.msra.mxu0 0.0
    %217 = vmatpush.msra.mxu0 0.0
    %218 = vmatpush.msra.mxu0 0.0
    %219 = vmatpush.msra.mxu0 0.0
    %220 = vmatpush.msra.mxu0 0.0
    %221 = vmatpush.msra.mxu0 0.0
    %222 = vmatpush.msra.mxu0 0.0
    %223 = vmatpush.msra.mxu0 0.0
    %224 = vmatpush.msra.mxu0 %v205
    %225 = vmatpush.msra.mxu0 %v204
    %226 = vmatmul.f32.gmra.mxu0 %v164
    %v227 = vpop.f32.mrf.mxu0
    %v228 = vadd.f32 %v208, %v227
    %229 = vmatmul.f32.gmra.mxu0 %v167
    %v230 = vpop.f32.mrf.mxu0
    %v231 = vadd.f32 %v208, %v230
    %232 = vmatmul.f32.gmra.mxu0 %v170
    %v233 = vpop.f32.mrf.mxu0
    %v234 = vadd.f32 %v208, %v233
    %235 = vmatmul.f32.gmra.mxu0 %v173
    %v236 = vpop.f32.mrf.mxu0
    %v237 = vadd.f32 %v208, %v236
    %238 = vdwg.mxu0
    %240 = vrot.lane.b32.xlu0 %v151, 120
    %v241 = vpop.permute.xlu0 %240
    %242 = vrot.lane.b32.xlu0 %v151, 112
    %v243 = vpop.permute.xlu0 %242
    %244 = vrot.lane.b32.xlu0 %v151, 104
    %v245 = vpop.permute.xlu0 %244
    %247 = vrot.lane.b32.xlu0 %v154, 120
    %v248 = vpop.permute.xlu0 %247
    %249 = vrot.lane.b32.xlu0 %v154, 112
    %v250 = vpop.permute.xlu0 %249
    %251 = vrot.lane.b32.xlu0 %v154, 104
    %v252 = vpop.permute.xlu0 %251
    %255 = vrot.lane.b32.xlu0 %v193, 120
    %v256 = vpop.permute.xlu0 %255
    %257 = vrot.lane.b32.xlu0 %v196, 120
    %v258 = vpop.permute.xlu0 %257
    %259 = vrot.lane.b32.xlu0 %v193, 112
    %v260 = vpop.permute.xlu0 %259
    %261 = vrot.lane.b32.xlu0 %v196, 112
    %v262 = vpop.permute.xlu0 %261
    %263 = vrot.lane.b32.xlu0 %v193, 104
    %v264 = vpop.permute.xlu0 %263
    %265 = vrot.lane.b32.xlu0 %v196, 104
    %v266 = vpop.permute.xlu0 %265
    %269 = vrot.lane.b32.xlu0 %v199, 120
    %v270 = vpop.permute.xlu0 %269
    %271 = vrot.lane.b32.xlu0 %v202, 120
    %v272 = vpop.permute.xlu0 %271
    %273 = vrot.lane.b32.xlu0 %v199, 112
    %v274 = vpop.permute.xlu0 %273
    %275 = vrot.lane.b32.xlu0 %v202, 112
    %v276 = vpop.permute.xlu0 %275
    %277 = vrot.lane.b32.xlu0 %v199, 104
    %v278 = vpop.permute.xlu0 %277
    %279 = vrot.lane.b32.xlu0 %v202, 104
    %v280 = vpop.permute.xlu0 %279
    %283 = vrot.lane.b32.xlu0 %v228, 120
    %v284 = vpop.permute.xlu0 %283
    %285 = vrot.lane.b32.xlu0 %v231, 120
    %v286 = vpop.permute.xlu0 %285
    %289 = vrot.lane.b32.xlu0 %v228, 112
    %v290 = vpop.permute.xlu0 %289
    %291 = vrot.lane.b32.xlu0 %v231, 112
    %v292 = vpop.permute.xlu0 %291
    %295 = vrot.lane.b32.xlu0 %v228, 104
    %v296 = vpop.permute.xlu0 %295
    %297 = vrot.lane.b32.xlu0 %v231, 104
    %v298 = vpop.permute.xlu0 %297
    %303 = vrot.lane.b32.xlu0 %v234, 120
    %v304 = vpop.permute.xlu0 %303
    %305 = vrot.lane.b32.xlu0 %v237, 120
    %v306 = vpop.permute.xlu0 %305
    %309 = vrot.lane.b32.xlu0 %v234, 112
    %v310 = vpop.permute.xlu0 %309
    %311 = vrot.lane.b32.xlu0 %v237, 112
    %v312 = vpop.permute.xlu0 %311
    %315 = vrot.lane.b32.xlu0 %v234, 104
    %v316 = vpop.permute.xlu0 %315
    %317 = vrot.lane.b32.xlu0 %v237, 104
    %v318 = vpop.permute.xlu0 %317
    %vm321 = vcmask 64512
    %v322 = vsel %vm321, %v151, 0
    %v324 = vsel %vm321, %v193, 0
    %v326 = vsel %vm321, %v196, 0
    %328 = vmatpush.xpose.msra.mxu0 0.0
    %329 = vmatpush.xpose.msra.mxu0 0.0
    %330 = vmatpush.xpose.msra.mxu0 0.0
    %331 = vmatpush.xpose.msra.mxu0 0.0
    %332 = vmatpush.xpose.msra.mxu0 0.0
    %333 = vmatpush.xpose.msra.mxu0 0.0
    %334 = vmatpush.xpose.msra.mxu0 0.0
    %335 = vmatpush.xpose.msra.mxu0 0.0
    %336 = vmatpush.xpose.msra.mxu0 0.0
    %337 = vmatpush.xpose.msra.mxu0 0.0
    %338 = vmatpush.xpose.msra.mxu0 0.0
    %339 = vmatpush.xpose.msra.mxu0 0.0
    %340 = vmatpush.xpose.msra.mxu0 0.0
    %341 = vmatpush.xpose.msra.mxu0 0.0
    %342 = vmatpush.xpose.msra.mxu0 %v326
    %343 = vmatpush.xpose.msra.mxu0 %v324
    %344 = vmatmul.f32.gmra.mxu0 %v322
    %v345 = vpop.f32.mrf.mxu0
    %v346 = vadd.f32 0.0, %v345
    %347 = vdwg.mxu0
    %v348 = vsel %vm321, %v241, 0
    %v350 = vsel %vm321, %v256, 0
    %v352 = vsel %vm321, %v258, 0
    %354 = vmatpush.xpose.msra.mxu0 0.0
    %355 = vmatpush.xpose.msra.mxu0 0.0
    %356 = vmatpush.xpose.msra.mxu0 0.0
    %357 = vmatpush.xpose.msra.mxu0 0.0
    %358 = vmatpush.xpose.msra.mxu0 0.0
    %359 = vmatpush.xpose.msra.mxu0 0.0
    %360 = vmatpush.xpose.msra.mxu0 0.0
    %361 = vmatpush.xpose.msra.mxu0 0.0
    %362 = vmatpush.xpose.msra.mxu0 0.0
    %363 = vmatpush.xpose.msra.mxu0 0.0
    %364 = vmatpush.xpose.msra.mxu0 0.0
    %365 = vmatpush.xpose.msra.mxu0 0.0
    %366 = vmatpush.xpose.msra.mxu0 0.0
    %367 = vmatpush.xpose.msra.mxu0 0.0
    %368 = vmatpush.xpose.msra.mxu0 %v352
    %369 = vmatpush.xpose.msra.mxu0 %v350
    %370 = vmatmul.f32.gmra.mxu0 %v348
    %v371 = vpop.f32.mrf.mxu0
    %v372 = vadd.f32 0.0, %v371
    %373 = vdwg.mxu0
    %v374 = vsel %vm321, %v243, 0
    %v376 = vsel %vm321, %v260, 0
    %v378 = vsel %vm321, %v262, 0
    %380 = vmatpush.xpose.msra.mxu0 0.0
    %381 = vmatpush.xpose.msra.mxu0 0.0
    %382 = vmatpush.xpose.msra.mxu0 0.0
    %383 = vmatpush.xpose.msra.mxu0 0.0
    %384 = vmatpush.xpose.msra.mxu0 0.0
    %385 = vmatpush.xpose.msra.mxu0 0.0
    %386 = vmatpush.xpose.msra.mxu0 0.0
    %387 = vmatpush.xpose.msra.mxu0 0.0
    %388 = vmatpush.xpose.msra.mxu0 0.0
    %389 = vmatpush.xpose.msra.mxu0 0.0
    %390 = vmatpush.xpose.msra.mxu0 0.0
    %391 = vmatpush.xpose.msra.mxu0 0.0
    %392 = vmatpush.xpose.msra.mxu0 0.0
    %393 = vmatpush.xpose.msra.mxu0 0.0
    %394 = vmatpush.xpose.msra.mxu0 %v378
    %395 = vmatpush.xpose.msra.mxu0 %v376
    %396 = vmatmul.f32.gmra.mxu0 %v374
    %v397 = vpop.f32.mrf.mxu0
    %v398 = vadd.f32 0.0, %v397
    %399 = vdwg.mxu0
    %v400 = vsel %vm321, %v245, 0
    %v402 = vsel %vm321, %v264, 0
    %v404 = vsel %vm321, %v266, 0
    %406 = vmatpush.xpose.msra.mxu0 0.0
    %407 = vmatpush.xpose.msra.mxu0 0.0
    %408 = vmatpush.xpose.msra.mxu0 0.0
    %409 = vmatpush.xpose.msra.mxu0 0.0
    %410 = vmatpush.xpose.msra.mxu0 0.0
    %411 = vmatpush.xpose.msra.mxu0 0.0
    %412 = vmatpush.xpose.msra.mxu0 0.0
    %413 = vmatpush.xpose.msra.mxu0 0.0
    %414 = vmatpush.xpose.msra.mxu0 0.0
    %415 = vmatpush.xpose.msra.mxu0 0.0
    %416 = vmatpush.xpose.msra.mxu0 0.0
    %417 = vmatpush.xpose.msra.mxu0 0.0
    %418 = vmatpush.xpose.msra.mxu0 0.0
    %419 = vmatpush.xpose.msra.mxu0 0.0
    %420 = vmatpush.xpose.msra.mxu0 %v404
    %421 = vmatpush.xpose.msra.mxu0 %v402
    %422 = vmatmul.f32.gmra.mxu0 %v400
    %v423 = vpop.f32.mrf.mxu0
    %v424 = vadd.f32 0.0, %v423
    %425 = vdwg.mxu0
    %v426 = vsel %vm321, %v154, 0
    %v428 = vsel %vm321, %v199, 0
    %v430 = vsel %vm321, %v202, 0
    %432 = vmatpush.xpose.msra.mxu0 0.0
    %433 = vmatpush.xpose.msra.mxu0 0.0
    %434 = vmatpush.xpose.msra.mxu0 0.0
    %435 = vmatpush.xpose.msra.mxu0 0.0
    %436 = vmatpush.xpose.msra.mxu0 0.0
    %437 = vmatpush.xpose.msra.mxu0 0.0
    %438 = vmatpush.xpose.msra.mxu0 0.0
    %439 = vmatpush.xpose.msra.mxu0 0.0
    %440 = vmatpush.xpose.msra.mxu0 0.0
    %441 = vmatpush.xpose.msra.mxu0 0.0
    %442 = vmatpush.xpose.msra.mxu0 0.0
    %443 = vmatpush.xpose.msra.mxu0 0.0
    %444 = vmatpush.xpose.msra.mxu0 0.0
    %445 = vmatpush.xpose.msra.mxu0 0.0
    %446 = vmatpush.xpose.msra.mxu0 %v430
    %447 = vmatpush.xpose.msra.mxu0 %v428
    %448 = vmatmul.f32.gmra.mxu0 %v426
    %v449 = vpop.f32.mrf.mxu0
    %v450 = vadd.f32 0.0, %v449
    %451 = vdwg.mxu0
    %v452 = vsel %vm321, %v248, 0
    %v454 = vsel %vm321, %v270, 0
    %v456 = vsel %vm321, %v272, 0
    %458 = vmatpush.xpose.msra.mxu0 0.0
    %459 = vmatpush.xpose.msra.mxu0 0.0
    %460 = vmatpush.xpose.msra.mxu0 0.0
    %461 = vmatpush.xpose.msra.mxu0 0.0
    %462 = vmatpush.xpose.msra.mxu0 0.0
    %463 = vmatpush.xpose.msra.mxu0 0.0
    %464 = vmatpush.xpose.msra.mxu0 0.0
    %465 = vmatpush.xpose.msra.mxu0 0.0
    %466 = vmatpush.xpose.msra.mxu0 0.0
    %467 = vmatpush.xpose.msra.mxu0 0.0
    %468 = vmatpush.xpose.msra.mxu0 0.0
    %469 = vmatpush.xpose.msra.mxu0 0.0
    %470 = vmatpush.xpose.msra.mxu0 0.0
    %471 = vmatpush.xpose.msra.mxu0 0.0
    %472 = vmatpush.xpose.msra.mxu0 %v456
    %473 = vmatpush.xpose.msra.mxu0 %v454
    %474 = vmatmul.f32.gmra.mxu0 %v452
    %v475 = vpop.f32.mrf.mxu0
    %v476 = vadd.f32 0.0, %v475
    %477 = vdwg.mxu0
    %v478 = vsel %vm321, %v250, 0
    %v480 = vsel %vm321, %v274, 0
    %v482 = vsel %vm321, %v276, 0
    %484 = vmatpush.xpose.msra.mxu0 0.0
    %485 = vmatpush.xpose.msra.mxu0 0.0
    %486 = vmatpush.xpose.msra.mxu0 0.0
    %487 = vmatpush.xpose.msra.mxu0 0.0
    %488 = vmatpush.xpose.msra.mxu0 0.0
    %489 = vmatpush.xpose.msra.mxu0 0.0
    %490 = vmatpush.xpose.msra.mxu0 0.0
    %491 = vmatpush.xpose.msra.mxu0 0.0
    %492 = vmatpush.xpose.msra.mxu0 0.0
    %493 = vmatpush.xpose.msra.mxu0 0.0
    %494 = vmatpush.xpose.msra.mxu0 0.0
    %495 = vmatpush.xpose.msra.mxu0 0.0
    %496 = vmatpush.xpose.msra.mxu0 0.0
    %497 = vmatpush.xpose.msra.mxu0 0.0
    %498 = vmatpush.xpose.msra.mxu0 %v482
    %499 = vmatpush.xpose.msra.mxu0 %v480
    %500 = vmatmul.f32.gmra.mxu0 %v478
    %v501 = vpop.f32.mrf.mxu0
    %v502 = vadd.f32 0.0, %v501
    %503 = vdwg.mxu0
    %v504 = vsel %vm321, %v252, 0
    %v506 = vsel %vm321, %v278, 0
    %v508 = vsel %vm321, %v280, 0
    %510 = vmatpush.xpose.msra.mxu0 0.0
    %511 = vmatpush.xpose.msra.mxu0 0.0
    %512 = vmatpush.xpose.msra.mxu0 0.0
    %513 = vmatpush.xpose.msra.mxu0 0.0
    %514 = vmatpush.xpose.msra.mxu0 0.0
    %515 = vmatpush.xpose.msra.mxu0 0.0
    %516 = vmatpush.xpose.msra.mxu0 0.0
    %517 = vmatpush.xpose.msra.mxu0 0.0
    %518 = vmatpush.xpose.msra.mxu0 0.0
    %519 = vmatpush.xpose.msra.mxu0 0.0
    %520 = vmatpush.xpose.msra.mxu0 0.0
    %521 = vmatpush.xpose.msra.mxu0 0.0
    %522 = vmatpush.xpose.msra.mxu0 0.0
    %523 = vmatpush.xpose.msra.mxu0 0.0
    %524 = vmatpush.xpose.msra.mxu0 %v508
    %525 = vmatpush.xpose.msra.mxu0 %v506
    %526 = vmatmul.f32.gmra.mxu0 %v504
    %v527 = vpop.f32.mrf.mxu0
    %v528 = vadd.f32 0.0, %v527
    %529 = vdwg.mxu0
    %v530 = vsel %vm162, %v346, -inf
    %531 = vmax.xlane.f32.xlu0 %v530
    %v532 = vpop.xlane.xlu0 %531
    %v533 = vsel %vm162, %v372, -inf
    %534 = vmax.xlane.f32.xlu0 %v533
    %v535 = vpop.xlane.xlu0 %534
    %v536 = vsel %vm162, %v398, -inf
    %537 = vmax.xlane.f32.xlu0 %v536
    %v538 = vpop.xlane.xlu0 %537
    %v539 = vsel %vm162, %v424, -inf
    %540 = vmax.xlane.f32.xlu0 %v539
    %v541 = vpop.xlane.xlu0 %540
    %v542 = vsel %vm162, %v450, -inf
    %543 = vmax.xlane.f32.xlu0 %v542
    %v544 = vpop.xlane.xlu0 %543
    %v545 = vsel %vm162, %v476, -inf
    %546 = vmax.xlane.f32.xlu0 %v545
    %v547 = vpop.xlane.xlu0 %546
    %v548 = vsel %vm162, %v502, -inf
    %549 = vmax.xlane.f32.xlu0 %v548
    %v550 = vpop.xlane.xlu0 %549
    %v551 = vsel %vm162, %v528, -inf
    %552 = vmax.xlane.f32.xlu0 %v551
    %v553 = vpop.xlane.xlu0 %552
    %v554 = vsub.f32 %v346, %v532
    %v555 = vsub.f32 %v372, %v535
    %v556 = vsub.f32 %v398, %v538
    %v557 = vsub.f32 %v424, %v541
    %v558 = vsub.f32 %v450, %v544
    %v559 = vsub.f32 %v476, %v547
    %v560 = vsub.f32 %v502, %v550
    %v561 = vsub.f32 %v528, %v553
    %v562 = vmul.f32 %v554, 1.442695
    %v563 = vpow.pop %v562
    %v564 = vmul.f32 %v555, 1.442695
    %v565 = vpow.pop %v564
    %v566 = vmul.f32 %v556, 1.442695
    %v567 = vpow.pop %v566
    %v568 = vmul.f32 %v557, 1.442695
    %v569 = vpow.pop %v568
    %v570 = vmul.f32 %v558, 1.442695
    %v571 = vpow.pop %v570
    %v572 = vmul.f32 %v559, 1.442695
    %v573 = vpow.pop %v572
    %v574 = vmul.f32 %v560, 1.442695
    %v575 = vpow.pop %v574
    %v576 = vmul.f32 %v561, 1.442695
    %v577 = vpow.pop %v576
    %v578 = vsel %vm162, %v563, 0.0
    %579 = vadd.xlane.f32.xlu0 %v578
    %v580 = vpop.xlane.xlu0 %579
    %v581 = vsel %vm162, %v565, 0.0
    %582 = vadd.xlane.f32.xlu0 %v581
    %v583 = vpop.xlane.xlu0 %582
    %v584 = vsel %vm162, %v567, 0.0
    %585 = vadd.xlane.f32.xlu0 %v584
    %v586 = vpop.xlane.xlu0 %585
    %v587 = vsel %vm162, %v569, 0.0
    %588 = vadd.xlane.f32.xlu0 %v587
    %v589 = vpop.xlane.xlu0 %588
    %v590 = vsel %vm162, %v571, 0.0
    %591 = vadd.xlane.f32.xlu0 %v590
    %v592 = vpop.xlane.xlu0 %591
    %v593 = vsel %vm162, %v573, 0.0
    %594 = vadd.xlane.f32.xlu0 %v593
    %v595 = vpop.xlane.xlu0 %594
    %v596 = vsel %vm162, %v575, 0.0
    %597 = vadd.xlane.f32.xlu0 %v596
    %v598 = vpop.xlane.xlu0 %597
    %v599 = vsel %vm162, %v577, 0.0
    %600 = vadd.xlane.f32.xlu0 %v599
    %v601 = vpop.xlane.xlu0 %600
    %v602 = vrcp.pop %v580
    %v603 = vrcp.pop %v583
    %v604 = vrcp.pop %v586
    %v605 = vrcp.pop %v589
    %v606 = vrcp.pop %v592
    %v607 = vrcp.pop %v595
    %v608 = vrcp.pop %v598
    %v609 = vrcp.pop %v601
    %v610 = vmul.f32 %v563, %v602
    %v611 = vmul.f32 %v565, %v603
    %v612 = vmul.f32 %v567, %v604
    %v613 = vmul.f32 %v569, %v605
    %v614 = vmul.f32 %v571, %v606
    %v615 = vmul.f32 %v573, %v607
    %v616 = vmul.f32 %v575, %v608
    %v617 = vmul.f32 %v577, %v609
    %v619 = vsel %vm162, %v610, 0
    %621 = vmatpush.msra.mxu0 0.0
    %622 = vmatpush.msra.mxu0 0.0
    %623 = vmatpush.msra.mxu0 0.0
    %624 = vmatpush.msra.mxu0 0.0
    %625 = vmatpush.msra.mxu0 0.0
    %626 = vmatpush.msra.mxu0 0.0
    %627 = vmatpush.msra.mxu0 0.0
    %628 = vmatpush.msra.mxu0 0.0
    %629 = vmatpush.msra.mxu0 0.0
    %630 = vmatpush.msra.mxu0 0.0
    %631 = vmatpush.msra.mxu0 0.0
    %632 = vmatpush.msra.mxu0 0.0
    %633 = vmatpush.msra.mxu0 0.0
    %634 = vmatpush.msra.mxu0 0.0
    %635 = vmatpush.msra.mxu0 %v231
    %636 = vmatpush.msra.mxu0 %v228
    %637 = vmatmul.f32.gmra.mxu0 %v619
    %v638 = vpop.f32.mrf.mxu0
    %v639 = vadd.f32 0.0, %v638
    %640 = vdwg.mxu0
    %v642 = vsel %vm162, %v611, 0
    %644 = vmatpush.msra.mxu0 0.0
    %645 = vmatpush.msra.mxu0 0.0
    %646 = vmatpush.msra.mxu0 0.0
    %647 = vmatpush.msra.mxu0 0.0
    %648 = vmatpush.msra.mxu0 0.0
    %649 = vmatpush.msra.mxu0 0.0
    %650 = vmatpush.msra.mxu0 0.0
    %651 = vmatpush.msra.mxu0 0.0
    %652 = vmatpush.msra.mxu0 0.0
    %653 = vmatpush.msra.mxu0 0.0
    %654 = vmatpush.msra.mxu0 0.0
    %655 = vmatpush.msra.mxu0 0.0
    %656 = vmatpush.msra.mxu0 0.0
    %657 = vmatpush.msra.mxu0 0.0
    %658 = vmatpush.msra.mxu0 %v286
    %659 = vmatpush.msra.mxu0 %v284
    %660 = vmatmul.f32.gmra.mxu0 %v642
    %v661 = vpop.f32.mrf.mxu0
    %v662 = vadd.f32 0.0, %v661
    %663 = vdwg.mxu0
    %v665 = vsel %vm162, %v612, 0
    %667 = vmatpush.msra.mxu0 0.0
    %668 = vmatpush.msra.mxu0 0.0
    %669 = vmatpush.msra.mxu0 0.0
    %670 = vmatpush.msra.mxu0 0.0
    %671 = vmatpush.msra.mxu0 0.0
    %672 = vmatpush.msra.mxu0 0.0
    %673 = vmatpush.msra.mxu0 0.0
    %674 = vmatpush.msra.mxu0 0.0
    %675 = vmatpush.msra.mxu0 0.0
    %676 = vmatpush.msra.mxu0 0.0
    %677 = vmatpush.msra.mxu0 0.0
    %678 = vmatpush.msra.mxu0 0.0
    %679 = vmatpush.msra.mxu0 0.0
    %680 = vmatpush.msra.mxu0 0.0
    %681 = vmatpush.msra.mxu0 %v292
    %682 = vmatpush.msra.mxu0 %v290
    %683 = vmatmul.f32.gmra.mxu0 %v665
    %v684 = vpop.f32.mrf.mxu0
    %v685 = vadd.f32 0.0, %v684
    %686 = vdwg.mxu0
    %v688 = vsel %vm162, %v613, 0
    %690 = vmatpush.msra.mxu0 0.0
    %691 = vmatpush.msra.mxu0 0.0
    %692 = vmatpush.msra.mxu0 0.0
    %693 = vmatpush.msra.mxu0 0.0
    %694 = vmatpush.msra.mxu0 0.0
    %695 = vmatpush.msra.mxu0 0.0
    %696 = vmatpush.msra.mxu0 0.0
    %697 = vmatpush.msra.mxu0 0.0
    %698 = vmatpush.msra.mxu0 0.0
    %699 = vmatpush.msra.mxu0 0.0
    %700 = vmatpush.msra.mxu0 0.0
    %701 = vmatpush.msra.mxu0 0.0
    %702 = vmatpush.msra.mxu0 0.0
    %703 = vmatpush.msra.mxu0 0.0
    %704 = vmatpush.msra.mxu0 %v298
    %705 = vmatpush.msra.mxu0 %v296
    %706 = vmatmul.f32.gmra.mxu0 %v688
    %v707 = vpop.f32.mrf.mxu0
    %v708 = vadd.f32 0.0, %v707
    %709 = vdwg.mxu0
    %v711 = vsel %vm162, %v614, 0
    %713 = vmatpush.msra.mxu0 0.0
    %714 = vmatpush.msra.mxu0 0.0
    %715 = vmatpush.msra.mxu0 0.0
    %716 = vmatpush.msra.mxu0 0.0
    %717 = vmatpush.msra.mxu0 0.0
    %718 = vmatpush.msra.mxu0 0.0
    %719 = vmatpush.msra.mxu0 0.0
    %720 = vmatpush.msra.mxu0 0.0
    %721 = vmatpush.msra.mxu0 0.0
    %722 = vmatpush.msra.mxu0 0.0
    %723 = vmatpush.msra.mxu0 0.0
    %724 = vmatpush.msra.mxu0 0.0
    %725 = vmatpush.msra.mxu0 0.0
    %726 = vmatpush.msra.mxu0 0.0
    %727 = vmatpush.msra.mxu0 %v237
    %728 = vmatpush.msra.mxu0 %v234
    %729 = vmatmul.f32.gmra.mxu0 %v711
    %v730 = vpop.f32.mrf.mxu0
    %v731 = vadd.f32 0.0, %v730
    %732 = vdwg.mxu0
    %v734 = vsel %vm162, %v615, 0
    %736 = vmatpush.msra.mxu0 0.0
    %737 = vmatpush.msra.mxu0 0.0
    %738 = vmatpush.msra.mxu0 0.0
    %739 = vmatpush.msra.mxu0 0.0
    %740 = vmatpush.msra.mxu0 0.0
    %741 = vmatpush.msra.mxu0 0.0
    %742 = vmatpush.msra.mxu0 0.0
    %743 = vmatpush.msra.mxu0 0.0
    %744 = vmatpush.msra.mxu0 0.0
    %745 = vmatpush.msra.mxu0 0.0
    %746 = vmatpush.msra.mxu0 0.0
    %747 = vmatpush.msra.mxu0 0.0
    %748 = vmatpush.msra.mxu0 0.0
    %749 = vmatpush.msra.mxu0 0.0
    %750 = vmatpush.msra.mxu0 %v306
    %751 = vmatpush.msra.mxu0 %v304
    %752 = vmatmul.f32.gmra.mxu0 %v734
    %v753 = vpop.f32.mrf.mxu0
    %v754 = vadd.f32 0.0, %v753
    %755 = vdwg.mxu0
    %v757 = vsel %vm162, %v616, 0
    %759 = vmatpush.msra.mxu0 0.0
    %760 = vmatpush.msra.mxu0 0.0
    %761 = vmatpush.msra.mxu0 0.0
    %762 = vmatpush.msra.mxu0 0.0
    %763 = vmatpush.msra.mxu0 0.0
    %764 = vmatpush.msra.mxu0 0.0
    %765 = vmatpush.msra.mxu0 0.0
    %766 = vmatpush.msra.mxu0 0.0
    %767 = vmatpush.msra.mxu0 0.0
    %768 = vmatpush.msra.mxu0 0.0
    %769 = vmatpush.msra.mxu0 0.0
    %770 = vmatpush.msra.mxu0 0.0
    %771 = vmatpush.msra.mxu0 0.0
    %772 = vmatpush.msra.mxu0 0.0
    %773 = vmatpush.msra.mxu0 %v312
    %774 = vmatpush.msra.mxu0 %v310
    %775 = vmatmul.f32.gmra.mxu0 %v757
    %v776 = vpop.f32.mrf.mxu0
    %v777 = vadd.f32 0.0, %v776
    %778 = vdwg.mxu0
    %v780 = vsel %vm162, %v617, 0
    %782 = vmatpush.msra.mxu0 0.0
    %783 = vmatpush.msra.mxu0 0.0
    %784 = vmatpush.msra.mxu0 0.0
    %785 = vmatpush.msra.mxu0 0.0
    %786 = vmatpush.msra.mxu0 0.0
    %787 = vmatpush.msra.mxu0 0.0
    %788 = vmatpush.msra.mxu0 0.0
    %789 = vmatpush.msra.mxu0 0.0
    %790 = vmatpush.msra.mxu0 0.0
    %791 = vmatpush.msra.mxu0 0.0
    %792 = vmatpush.msra.mxu0 0.0
    %793 = vmatpush.msra.mxu0 0.0
    %794 = vmatpush.msra.mxu0 0.0
    %795 = vmatpush.msra.mxu0 0.0
    %796 = vmatpush.msra.mxu0 %v318
    %797 = vmatpush.msra.mxu0 %v316
    %798 = vmatmul.f32.gmra.mxu0 %v780
    %v799 = vpop.f32.mrf.mxu0
    %v800 = vadd.f32 0.0, %v799
    %801 = vdwg.mxu0
    %803 = vrot.lane.b32.xlu0 %v662, 8
    %v804 = vpop.permute.xlu0 %803
    %807 = vrot.lane.b32.xlu0 %v685, 16
    %v808 = vpop.permute.xlu0 %807
    %811 = vrot.lane.b32.xlu0 %v708, 24
    %v812 = vpop.permute.xlu0 %811
    %v814 = vsel %vm321, %v639, %v804
    %v815 = vsel %vm162, %v814, %v808
    %vm816 = vcmask 195584
    %v817 = vsel %vm816, %v815, %v812
    %819 = vrot.lane.b32.xlu0 %v754, 8
    %v820 = vpop.permute.xlu0 %819
    %823 = vrot.lane.b32.xlu0 %v777, 16
    %v824 = vpop.permute.xlu0 %823
    %827 = vrot.lane.b32.xlu0 %v800, 24
    %v828 = vpop.permute.xlu0 %827
    %v830 = vsel %vm321, %v731, %v820
    %v831 = vsel %vm162, %v830, %v824
    %v832 = vsel %vm816, %v831, %v828
    %v833 = vld [vmem:[#allocation8] sm:$0xff]
    %v834 = vld [vmem:[#allocation8 + $0x8] sm:$0xff]
    %v835 = vld [vmem:[#allocation8 + $0x10] sm:$0xff]
    %v836 = vld [vmem:[#allocation8 + $0x18] sm:$0xff]
    %v837 = vld [vmem:[%s10] sm:$0x1]
    %v839 = vperm.slane %v837, 0
    %v842 = vsel %vm126, %v817, 0
    %v845 = vsel %vm126, %v832, 0
    %847 = vmatpush.msra.mxu0 0.0
    %848 = vmatpush.msra.mxu0 0.0
    %849 = vmatpush.msra.mxu0 0.0
    %850 = vmatpush.msra.mxu0 0.0
    %851 = vmatpush.msra.mxu0 0.0
    %852 = vmatpush.msra.mxu0 0.0
    %853 = vmatpush.msra.mxu0 0.0
    %854 = vmatpush.msra.mxu0 0.0
    %855 = vmatpush.msra.mxu0 0.0
    %856 = vmatpush.msra.mxu0 0.0
    %857 = vmatpush.msra.mxu0 0.0
    %858 = vmatpush.msra.mxu0 0.0
    %859 = vmatpush.msra.mxu0 %v836
    %860 = vmatpush.msra.mxu0 %v835
    %861 = vmatpush.msra.mxu0 %v834
    %862 = vmatpush.msra.mxu0 %v833
    %863 = vmatmul.f32.gmra.mxu0 %v842
    %v864 = vpop.f32.mrf.mxu0
    %v865 = vadd.f32 %v839, %v864
    %866 = vmatmul.f32.gmra.mxu0 %v845
    %v867 = vpop.f32.mrf.mxu0
    %v868 = vadd.f32 %v839, %v867
    %869 = vdwg.mxu0
    %v870 = vsel %vm126, %v865, 0.0
    %871 = vadd.xlane.f32.xlu0 %v870
    %v872 = vpop.xlane.xlu0 %871
    %v873 = vsel %vm126, %v868, 0.0
    %874 = vadd.xlane.f32.xlu0 %v873
    %v875 = vpop.xlane.xlu0 %874
    %v876 = vrcp.pop 32.0
    %v877 = vmul.f32 32.0, %v876
    %v878 = vsub.f32 1.0, %v877
    %v879 = vmul.f32 %v876, %v878
    %v880 = vadd.f32 %v876, %v879
    %vm881 = vweird.f32 %v876
    %v882 = vsel %vm881, %v876, %v880
    %v883 = vmul.f32 %v872, %v882
    %v884 = vmul.f32 %v875, %v882
    %v885 = vsub.f32 %v865, %v883
    %v886 = vsub.f32 %v868, %v884
    %v887 = vmul.f32 %v885, %v885
    %v888 = vmul.f32 %v886, %v886
    %v889 = vsel %vm126, %v887, 0.0
    %890 = vadd.xlane.f32.xlu0 %v889
    %v891 = vpop.xlane.xlu0 %890
    %v892 = vsel %vm126, %v888, 0.0
    %893 = vadd.xlane.f32.xlu0 %v892
    %v894 = vpop.xlane.xlu0 %893
    %v895 = vmul.f32 %v891, %v882
    %v896 = vmul.f32 %v894, %v882
    %v897 = vadd.f32 %v895, 1e-05
    %v898 = vadd.f32 %v896, 1e-05
    %v899 = vrsqrt.pop %v897
    %v900 = vmul.f32 %v899, %v897
    %v901 = vmul.f32 %v900, %v899
    %v902 = vmul.f32 0.5, %v901
    %v903 = vsub.f32 1.5, %v902
    %v904 = vmul.f32 %v899, %v903
    %vm905 = vweird.f32 %v897
    %vm906 = vweird.f32 %v899
    %vm907 = vmor %vm905, %vm906
    %v908 = vsel %vm907, %v899, %v904
    %v909 = vrsqrt.pop %v898
    %v910 = vmul.f32 %v909, %v898
    %v911 = vmul.f32 %v910, %v909
    %v912 = vmul.f32 0.5, %v911
    %v913 = vsub.f32 1.5, %v912
    %v914 = vmul.f32 %v909, %v913
    %vm915 = vweird.f32 %v898
    %vm916 = vweird.f32 %v909
    %vm917 = vmor %vm915, %vm916
    %v918 = vsel %vm917, %v909, %v914
    %v919 = vmul.f32 %v885, %v908
    %v920 = vmul.f32 %v886, %v918
    %v921 = vld [vmem:[%s11] sm:$0x1]
    %v923 = vperm.slane %v921, 0
    %v925 = vmul.f32 %v919, %v923
    %v926 = vmul.f32 %v920, %v923
    %v927 = vld [vmem:[%s12] sm:$0x1]
    %v929 = vperm.slane %v927, 0
    %v931 = vadd.f32 %v925, %v929
    %v932 = vadd.f32 %v926, %v929
    %933 = vst.msk [vmem:[#allocation10] sm:$0xff] %vm126, %v931
    %934 = vst.msk [vmem:[#allocation10 + $0x8] sm:$0xff] %vm126, %v932
    // Predicated region
    $region70: #{tpu_custom_call.1} parent=1 // pred_check
      _
    $region71: #{tpu_custom_call.1} parent=1 // pred_check_branch
      %936 = sbr.rel (0) target = $region73
    $region72: #{tpu_custom_call.1} parent=1 // pred_region
      %938 = vsyncadd [#allocation4], 0
      %s939 = sshll.u32 [#allocation10], 4
      %s940 = int_to_ptr.vmem [resolvable:$true] %s939
      %s941 = sshll.u32 %s13, 4
      %s942 = int_to_ptr.hbm [resolvable:$true] %s941
      %947 = dma.vmem_to_hbm [thread:$0]  %s940, 256, %s942, [#allocation4], 128, 128, 8
    $region73: #{tpu_custom_call.1} parent=1 // pred_fallthru
      _
    // Predicated region
    $region74: #{tpu_custom_call.1} parent=1 // pred_check
      _
    $region75: #{tpu_custom_call.1} parent=1 // pred_check_branch
      %949 = sbr.rel (0) target = $region77
    $region76: #{tpu_custom_call.1} parent=1 // pred_region
      %951 = dma.done [#allocation4], 256
    $region77: #{tpu_custom_call.1} parent=1 // pred_fallthru
      _
    %952 = vsyncpa [#allocation3], 1
    %953 = vsyncpa [#allocation6], 1
    %954 = vsyncpa [#allocation9], 1
    %955 = vsyncpa [#allocation4], 1

</llo_original>
